<compile_context>
chip_gen: v5e
topology: v5e:2x2
jax: 0.10.0
libtpu: 0.0.40
codegen_flags: <defaults>
</compile_context>

<pallas_src>
import functools

import jax
import jax.numpy as jnp
from jax.experimental import pallas as pl
from jax.experimental.pallas import tpu as pltpu


def _round_up(x: int, m: int) -> int:
    return ((x + m - 1) // m) * m


def _choose_tile_b(B: int, C: int, itemsize: int) -> int:
    """Byte-based tile sizing (perf feedback).

    Targets ~2 MiB streamed logits blocks (native dtype) and budgets
    2x logits buffers + ~4 (TB,C) f32 temporaries + 2x lane-padded (TB,3)
    target buffers against ~20 MiB so the kernel stays well inside the scoped
    VMEM limit on every TPU generation (incl. v7x's 64 MiB physical VMEM).
    """
    block_bytes = 2 * 1024 * 1024
    per_row_bytes = (
        2 * C * itemsize      # double-buffered logits block (native dtype)
        + 4 * C * 4           # in-kernel f32 temporaries (~4 x (TB, C) f32)
        + 2 * 128 * 4         # lane-padded (TB, 3) target double-buffer
    )
    budget = 20 * 1024 * 1024
    tile_b = min(block_bytes // max(C * itemsize, 1),
                 budget // max(per_row_bytes, 1),
                 8192)
    tile_b = min(tile_b, _round_up(B, 8))
    return max(8, (tile_b // 8) * 8)


def _mixup_loss_kernel(logits_ref, target_ref, out_ref,
                       s_nll1, s_nll2, s_lam, *, b_total: int, masked: bool):
    p = pl.program_id(0)            # batch slice (megacore) index
    i = pl.program_id(1)            # tile within the slice
    n_inner = pl.num_programs(1)

    @pl.when(i == 0)
    def _init():
        s_nll1[...] = jnp.zeros_like(s_nll1)
        s_nll2[...] = jnp.zeros_like(s_nll2)
        s_lam[...] = jnp.zeros_like(s_lam)

    logits = logits_ref[...].astype(jnp.float32)          # (TB, C)
    tgt = target_ref[...]                                  # (TB, 3)
    tb, c = logits.shape

    # Class indices carried as float in `target`; exact only for C < 2^24.
    t1 = tgt[:, 0:1].astype(jnp.int32)                     # (TB, 1)
    t2 = tgt[:, 1:2].astype(jnp.int32)                     # (TB, 1)
    lam = tgt[:, 2:3].astype(jnp.float32)                  # (TB, 1)

    # Numerically stable logsumexp over the class (lane) axis; no logp tensor.
    m = jnp.max(logits, axis=-1, keepdims=True)             # (TB, 1)
    lse = jnp.log(jnp.sum(jnp.exp(logits - m), axis=-1, keepdims=True)) + m

    # One-hot gather of the target-class logit from the RAW logits.
    # (1, C) iota broadcast against (TB, 1) targets -> no (TB, C) iota.
    cls = jax.lax.broadcasted_iota(jnp.int32, (1, c), 1)    # (1, C)
    sel1 = jnp.sum(jnp.where(cls == t1, logits, 0.0), axis=-1, keepdims=True)
    sel2 = jnp.sum(jnp.where(cls == t2, logits, 0.0), axis=-1, keepdims=True)
    nll1 = lse - sel1                                        # (TB, 1)
    nll2 = lse - sel2                                        # (TB, 1)

    if masked:
        # Mask rows of padded / clamped-duplicate tiles. jnp.where (not *mask)
        # so garbage/NaN in padded rows cannot leak into the sums.
        t = p * n_inner + i                                  # global tile index
        row = jax.lax.broadcasted_iota(jnp.int32, (tb, 1), 0) + t * tb
        valid = row < b_total                                # (TB, 1) bool
        nll1 = jnp.where(valid, nll1, 0.0)
        nll2 = jnp.where(valid, nll2, 0.0)
        lam = jnp.where(valid, lam, 0.0)

    s_nll1[...] += jnp.sum(nll1, axis=0, keepdims=True)
    s_nll2[...] += jnp.sum(nll2, axis=0, keepdims=True)
    s_lam[...] += jnp.sum(lam, axis=0, keepdims=True)

    @pl.when(i == n_inner - 1)
    def _finalize():
        # Write the per-slice partial sums into lanes 0..2 of a lane-aligned
        # (1, 8, 128) output block; the mean/mix combine happens in the wrapper.
        lane = jax.lax.broadcasted_iota(jnp.int32, (1, 8, 128), 2)
        sub = jax.lax.broadcasted_iota(jnp.int32, (1, 8, 128), 1)
        row0 = sub == 0
        blk = jnp.where(row0 & (lane == 0), s_nll1[...], 0.0)
        blk = blk + jnp.where(row0 & (lane == 1), s_nll2[...], 0.0)
        blk = blk + jnp.where(row0 & (lane == 2), s_lam[...], 0.0)
        out_ref[...] = blk.astype(out_ref.dtype)


def mixup_softmax_loss(logits: jax.Array, target: jax.Array,
                       *, tile_b: int | None = None) -> jax.Array:
    """logits: (B, C) float (any float dtype); target: (B, 3) = [cls1, cls2, lam]."""
    B, C = logits.shape
    assert target.shape == (B, 3)

    itemsize = jnp.dtype(logits.dtype).itemsize
    if tile_b is None:
        tile_b = _choose_tile_b(B, C, itemsize)
    else:
        tile_b = max(8, (int(tile_b) // 8) * 8)

    num_tiles = pl.cdiv(B, tile_b)
    # Leading 'parallel' axis: batch split across TensorCores (2x on v7x
    # megacore); runs as a plain sequential outer loop on single-TC chips.
    n_slices = 2 if num_tiles >= 2 else 1
    tiles_per_slice = pl.cdiv(num_tiles, n_slices)
    last_block = num_tiles - 1
    # Static: no masking needed iff the grid covers the batch exactly.
    masked = (n_slices * tiles_per_slice * tile_b) != B

    def in_map(p, i):
        # Clamp duplicated trailing tiles to the last valid block; the kernel
        # masks their rows out via the global row index (>= B).
        t = p * tiles_per_slice + i
        return (jnp.minimum(t, last_block), 0)

    kernel = functools.partial(_mixup_loss_kernel, b_total=B, masked=masked)

    partials = pl.pallas_call(
        kernel,
        out_shape=jax.ShapeDtypeStruct((n_slices, 8, 128), jnp.float32),
        grid=(n_slices, tiles_per_slice),
        in_specs=[
            # logits streamed in native dtype (no wrapper up-cast).
            pl.BlockSpec((tile_b, C), in_map),
            pl.BlockSpec((tile_b, 3), in_map),
        ],
        out_specs=pl.BlockSpec((1, 8, 128), lambda p, i: (p, 0, 0)),
        scratch_shapes=[
            pltpu.VMEM((1, 1), jnp.float32),   # sum nll1 (per slice)
            pltpu.VMEM((1, 1), jnp.float32),   # sum nll2 (per slice)
            pltpu.VMEM((1, 1), jnp.float32),   # sum lambda (per slice)
        ],
        compiler_params=pltpu.CompilerParams(
            dimension_semantics=("parallel", "arbitrary"),
            vmem_limit_bytes=48 * 1024 * 1024,
        ),
    )(logits, target)

    # Combine per-slice partial sums: exact rearrangement since loss1/loss2
    # are scalars -> d = loss1*mean(lam) + loss2*(1-mean(lam)).
    sums = jnp.sum(partials[:, 0, 0:3].astype(jnp.float32), axis=0)   # (3,)
    inv_b = jnp.float32(1.0 / B)
    loss1 = sums[0] * inv_b
    loss2 = sums[1] * inv_b
    mean_lam = sums[2] * inv_b
    return loss1 * mean_lam + loss2 * (1.0 - mean_lam)


def _reference_loss(logits, target):
    """Pure-JAX reference mirroring the PyTorch code path."""
    logits = logits.astype(jnp.float32)
    logp = jax.nn.log_softmax(logits, axis=-1)
    t1 = target[:, 0].astype(jnp.int32)
    t2 = target[:, 1].astype(jnp.int32)
    lam = target[:, 2].astype(jnp.float32)
    nll1 = -jnp.take_along_axis(logp, t1[:, None], axis=-1)[:, 0]
    nll2 = -jnp.take_along_axis(logp, t2[:, None], axis=-1)[:, 0]
    loss1 = jnp.mean(nll1)
    loss2 = jnp.mean(nll2)
    return jnp.mean(loss1 * lam + loss2 * (1.0 - lam))


def _make_inputs(key, B, C, dtype):
    k_logits, k_t1, k_t2, k_lam = jax.random.split(key, 4)
    logits = jax.random.normal(k_logits, (B, C), dtype=jnp.float32).astype(dtype)
    cls1 = jax.random.randint(k_t1, (B,), 0, C).astype(jnp.float32)
    cls2 = jax.random.randint(k_t2, (B,), 0, C).astype(jnp.float32)
    lam = jax.random.uniform(k_lam, (B,), dtype=jnp.float32)
    target = jnp.stack([cls1, cls2, lam], axis=1)            # (B, 3)
    return logits, target


if __name__ == "__main__":
    key = jax.random.PRNGKey(0)
    k_a, k_b, k_c = jax.random.split(key, 3)

    # 1) Small single-tile case (f32 logits): n_slices=1, no masking.
    logits, target = _make_inputs(k_a, 8, 16, jnp.float32)
    loss = mixup_softmax_loss(logits, target)
    jax.block_until_ready(loss)
    ref = _reference_loss(logits, target)
    assert jnp.allclose(loss, ref, atol=1e-5, rtol=1e-5), (loss, ref)

    # 2) Multi-tile bf16 case with a partial last tile AND a clamped duplicate
    #    tile (B=20, tile_b=8 -> 3 real tiles on a 2x2 grid): exercises the
    #    2-slice 'parallel' split, masked accumulation, and native-bf16 streaming.
    logits2, target2 = _make_inputs(k_b, 20, 256, jnp.bfloat16)
    loss2 = mixup_softmax_loss(logits2, target2, tile_b=8)
    jax.block_until_ready(loss2)
    ref2 = _reference_loss(logits2, target2)
    assert jnp.allclose(loss2, ref2, atol=1e-4, rtol=1e-4), (loss2, ref2)

    # 3) Evenly divisible case (B=32, tile_b=8 -> 2 slices x 2 tiles, no
    #    padding anywhere): exercises the statically unmasked fast path.
    logits3, target3 = _make_inputs(k_c, 32, 64, jnp.float32)
    loss3 = mixup_softmax_loss(logits3, target3, tile_b=8)
    jax.block_until_ready(loss3)
    ref3 = _reference_loss(logits3, target3)
    assert jnp.allclose(loss3, ref3, atol=1e-5, rtol=1e-5), (loss3, ref3)

    print("KERNEL_OK")
</pallas_src>

<mosaic_0001>
module attributes {stable_mosaic.version = 11 : i64} {
  func.func @_mixup_loss_kernel(%arg0: i32, %arg1: i32, %arg2: memref<8x16xf32, #tpu.memory_space<vmem>>, %arg3: memref<8x3xf32, #tpu.memory_space<vmem>>, %arg4: memref<1x8x128xf32, #tpu.memory_space<vmem>>, %arg5: memref<1x1xf32, #tpu.memory_space<vmem>>, %arg6: memref<1x1xf32, #tpu.memory_space<vmem>>, %arg7: memref<1x1xf32, #tpu.memory_space<vmem>>) attributes {dimension_semantics = [#tpu.dimension_semantics<parallel>, #tpu.dimension_semantics<arbitrary>], iteration_bounds = array<i64: 1, 1>, scalar_prefetch = 0 : i64, scratch_operands = 3 : i64, tpu.core_type = #tpu.core_type<tc>, window_params = [{transform_indices = @transform_0, window_bounds = array<i64: 8, 16>}, {transform_indices = @transform_1, window_bounds = array<i64: 8, 3>}, {transform_indices = @transform_2, window_bounds = array<i64: 1, 8, 128>}]} {
    %c0_i32 = arith.constant 0 : i32
    %0 = arith.cmpi eq, %arg1, %c0_i32 : i32
    %1 = arith.extui %0 : i1 to i32
    %c0_i32_0 = arith.constant 0 : i32
    %2 = arith.cmpi ne, %1, %c0_i32_0 : i32
    scf.if %2 {
      %cst_26 = arith.constant 0.000000e+00 : f32
      %54 = vector.broadcast %cst_26 : f32 to vector<1x1xf32>
      %c0_27 = arith.constant 0 : index
      %c0_28 = arith.constant 0 : index
      %55 = vector.load %arg5[%c0_27, %c0_28] : memref<1x1xf32, #tpu.memory_space<vmem>>, vector<1x1xf32>
      tpu.vector_store %arg5[%c0_27, %c0_28], %54 {strides = array<i32>} : memref<1x1xf32, #tpu.memory_space<vmem>>, vector<1x1xf32>,
      %cst_29 = arith.constant 0.000000e+00 : f32
      %56 = vector.broadcast %cst_29 : f32 to vector<1x1xf32>
      %c0_30 = arith.constant 0 : index
      %c0_31 = arith.constant 0 : index
      %57 = vector.load %arg6[%c0_30, %c0_31] : memref<1x1xf32, #tpu.memory_space<vmem>>, vector<1x1xf32>
      tpu.vector_store %arg6[%c0_30, %c0_31], %56 {strides = array<i32>} : memref<1x1xf32, #tpu.memory_space<vmem>>, vector<1x1xf32>,
      %cst_32 = arith.constant 0.000000e+00 : f32
      %58 = vector.broadcast %cst_32 : f32 to vector<1x1xf32>
      %c0_33 = arith.constant 0 : index
      %c0_34 = arith.constant 0 : index
      %59 = vector.load %arg7[%c0_33, %c0_34] : memref<1x1xf32, #tpu.memory_space<vmem>>, vector<1x1xf32>
      tpu.vector_store %arg7[%c0_33, %c0_34], %58 {strides = array<i32>} : memref<1x1xf32, #tpu.memory_space<vmem>>, vector<1x1xf32>,
    } else {
    }
    %c0 = arith.constant 0 : index
    %c0_1 = arith.constant 0 : index
    %3 = vector.load %arg2[%c0, %c0_1] : memref<8x16xf32, #tpu.memory_space<vmem>>, vector<8x16xf32>
    %c0_2 = arith.constant 0 : index
    %c0_3 = arith.constant 0 : index
    %4 = vector.load %arg3[%c0_2, %c0_3] : memref<8x3xf32, #tpu.memory_space<vmem>>, vector<8x3xf32>
    %5 = vector.extract_strided_slice %4 {offsets = [0, 0], sizes = [8, 1], strides = [1, 1]} : vector<8x3xf32> to vector<8x1xf32>
    %6 = arith.fptosi %5 : vector<8x1xf32> to vector<8x1xi32>
    %7 = vector.extract_strided_slice %4 {offsets = [0, 1], sizes = [8, 1], strides = [1, 1]} : vector<8x3xf32> to vector<8x1xf32>
    %8 = arith.fptosi %7 : vector<8x1xf32> to vector<8x1xi32>
    %9 = vector.extract_strided_slice %4 {offsets = [0, 2], sizes = [8, 1], strides = [1, 1]} : vector<8x3xf32> to vector<8x1xf32>
    %cst = arith.constant dense<0xFF800000> : vector<8xf32>
    %10 = vector.multi_reduction <maximumf>, %3, %cst [1] : vector<8x16xf32> to vector<8xf32>
    %11 = vector.shape_cast %10 : vector<8xf32> to vector<8x1xf32>
    %12 = vector.broadcast %11 : vector<8x1xf32> to vector<8x16xf32>
    %13 = arith.subf %3, %12 : vector<8x16xf32>
    %14 = math.exp %13 : vector<8x16xf32>
    %cst_4 = arith.constant dense<0.000000e+00> : vector<8xf32>
    %15 = vector.multi_reduction <add>, %14, %cst_4 [1] : vector<8x16xf32> to vector<8xf32>
    %16 = vector.shape_cast %15 : vector<8xf32> to vector<8x1xf32>
    %17 = math.log %16 : vector<8x1xf32>
    %18 = arith.addf %17, %11 : vector<8x1xf32>
    %19 = tpu.iota {dimensions = array<i32: 1>} : vector<1x16xi32>
    %20 = vector.broadcast %19 : vector<1x16xi32> to vector<8x16xi32>
    %21 = vector.broadcast %6 : vector<8x1xi32> to vector<8x16xi32>
    %22 = arith.cmpi eq, %20, %21 : vector<8x16xi32>
    %cst_5 = arith.constant 0.000000e+00 : f32
    %23 = vector.broadcast %cst_5 : f32 to vector<8x16xf32>
    %24 = arith.select %22, %3, %23 : vector<8x16xi1>, vector<8x16xf32>
    %cst_6 = arith.constant dense<0.000000e+00> : vector<8xf32>
    %25 = vector.multi_reduction <add>, %24, %cst_6 [1] : vector<8x16xf32> to vector<8xf32>
    %26 = vector.shape_cast %25 : vector<8xf32> to vector<8x1xf32>
    %27 = vector.broadcast %19 : vector<1x16xi32> to vector<8x16xi32>
    %28 = vector.broadcast %8 : vector<8x1xi32> to vector<8x16xi32>
    %29 = arith.cmpi eq, %27, %28 : vector<8x16xi32>
    %cst_7 = arith.constant 0.000000e+00 : f32
    %30 = vector.broadcast %cst_7 : f32 to vector<8x16xf32>
    %31 = arith.select %29, %3, %30 : vector<8x16xi1>, vector<8x16xf32>
    %cst_8 = arith.constant dense<0.000000e+00> : vector<8xf32>
    %32 = vector.multi_reduction <add>, %31, %cst_8 [1] : vector<8x16xf32> to vector<8xf32>
    %33 = vector.shape_cast %32 : vector<8xf32> to vector<8x1xf32>
    %34 = arith.subf %18, %26 : vector<8x1xf32>
    %35 = arith.subf %18, %33 : vector<8x1xf32>
    %c0_9 = arith.constant 0 : index
    %c0_10 = arith.constant 0 : index
    %36 = vector.load %arg5[%c0_9, %c0_10] : memref<1x1xf32, #tpu.memory_space<vmem>>, vector<1x1xf32>
    %cst_11 = arith.constant dense<0.000000e+00> : vector<1xf32>
    %37 = vector.multi_reduction <add>, %34, %cst_11 [0] : vector<8x1xf32> to vector<1xf32>
    %38 = vector.shape_cast %37 : vector<1xf32> to vector<1x1xf32>
    %39 = arith.addf %36, %38 : vector<1x1xf32>
    %c0_12 = arith.constant 0 : index
    %c0_13 = arith.constant 0 : index
    %40 = vector.load %arg5[%c0_12, %c0_13] : memref<1x1xf32, #tpu.memory_space<vmem>>, vector<1x1xf32>
    tpu.vector_store %arg5[%c0_12, %c0_13], %39 {strides = array<i32>} : memref<1x1xf32, #tpu.memory_space<vmem>>, vector<1x1xf32>,
    %c0_14 = arith.constant 0 : index
    %c0_15 = arith.constant 0 : index
    %41 = vector.load %arg6[%c0_14, %c0_15] : memref<1x1xf32, #tpu.memory_space<vmem>>, vector<1x1xf32>
    %cst_16 = arith.constant dense<0.000000e+00> : vector<1xf32>
    %42 = vector.multi_reduction <add>, %35, %cst_16 [0] : vector<8x1xf32> to vector<1xf32>
    %43 = vector.shape_cast %42 : vector<1xf32> to vector<1x1xf32>
    %44 = arith.addf %41, %43 : vector<1x1xf32>
    %c0_17 = arith.constant 0 : index
    %c0_18 = arith.constant 0 : index
    %45 = vector.load %arg6[%c0_17, %c0_18] : memref<1x1xf32, #tpu.memory_space<vmem>>, vector<1x1xf32>
    tpu.vector_store %arg6[%c0_17, %c0_18], %44 {strides = array<i32>} : memref<1x1xf32, #tpu.memory_space<vmem>>, vector<1x1xf32>,
    %c0_19 = arith.constant 0 : index
    %c0_20 = arith.constant 0 : index
    %46 = vector.load %arg7[%c0_19, %c0_20] : memref<1x1xf32, #tpu.memory_space<vmem>>, vector<1x1xf32>
    %cst_21 = arith.constant dense<0.000000e+00> : vector<1xf32>
    %47 = vector.multi_reduction <add>, %9, %cst_21 [0] : vector<8x1xf32> to vector<1xf32>
    %48 = vector.shape_cast %47 : vector<1xf32> to vector<1x1xf32>
    %49 = arith.addf %46, %48 : vector<1x1xf32>
    %c0_22 = arith.constant 0 : index
    %c0_23 = arith.constant 0 : index
    %50 = vector.load %arg7[%c0_22, %c0_23] : memref<1x1xf32, #tpu.memory_space<vmem>>, vector<1x1xf32>
    tpu.vector_store %arg7[%c0_22, %c0_23], %49 {strides = array<i32>} : memref<1x1xf32, #tpu.memory_space<vmem>>, vector<1x1xf32>,
    %c0_i32_24 = arith.constant 0 : i32
    %51 = arith.cmpi eq, %arg1, %c0_i32_24 : i32
    %52 = arith.extui %51 : i1 to i32
    %c0_i32_25 = arith.constant 0 : i32
    %53 = arith.cmpi ne, %52, %c0_i32_25 : i32
    scf.if %53 {
      %54 = tpu.iota {dimensions = array<i32: 2>} : vector<1x8x128xi32>
      %55 = tpu.iota {dimensions = array<i32: 1>} : vector<1x8x128xi32>
      %c0_i32_26 = arith.constant 0 : i32
      %56 = vector.broadcast %c0_i32_26 : i32 to vector<1x8x128xi32>
      %57 = arith.cmpi eq, %55, %56 : vector<1x8x128xi32>
      %c0_i32_27 = arith.constant 0 : i32
      %58 = vector.broadcast %c0_i32_27 : i32 to vector<1x8x128xi32>
      %59 = arith.cmpi eq, %54, %58 : vector<1x8x128xi32>
      %60 = arith.andi %57, %59 : vector<1x8x128xi1>
      %c0_28 = arith.constant 0 : index
      %c0_29 = arith.constant 0 : index
      %61 = vector.load %arg5[%c0_28, %c0_29] : memref<1x1xf32, #tpu.memory_space<vmem>>, vector<1x1xf32>
      %cst_30 = arith.constant 0.000000e+00 : f32
      %62 = vector.shape_cast %61 : vector<1x1xf32> to vector<1x1x1xf32>
      %63 = vector.broadcast %62 : vector<1x1x1xf32> to vector<1x8x128xf32>
      %64 = vector.broadcast %cst_30 : f32 to vector<1x8x128xf32>
      %65 = arith.select %60, %63, %64 : vector<1x8x128xi1>, vector<1x8x128xf32>
      %c1_i32 = arith.constant 1 : i32
      %66 = vector.broadcast %c1_i32 : i32 to vector<1x8x128xi32>
      %67 = arith.cmpi eq, %54, %66 : vector<1x8x128xi32>
      %68 = arith.andi %57, %67 : vector<1x8x128xi1>
      %c0_31 = arith.constant 0 : index
      %c0_32 = arith.constant 0 : index
      %69 = vector.load %arg6[%c0_31, %c0_32] : memref<1x1xf32, #tpu.memory_space<vmem>>, vector<1x1xf32>
      %cst_33 = arith.constant 0.000000e+00 : f32
      %70 = vector.shape_cast %69 : vector<1x1xf32> to vector<1x1x1xf32>
      %71 = vector.broadcast %70 : vector<1x1x1xf32> to vector<1x8x128xf32>
      %72 = vector.broadcast %cst_33 : f32 to vector<1x8x128xf32>
      %73 = arith.select %68, %71, %72 : vector<1x8x128xi1>, vector<1x8x128xf32>
      %74 = arith.addf %65, %73 : vector<1x8x128xf32>
      %c2_i32 = arith.constant 2 : i32
      %75 = vector.broadcast %c2_i32 : i32 to vector<1x8x128xi32>
      %76 = arith.cmpi eq, %54, %75 : vector<1x8x128xi32>
      %77 = arith.andi %57, %76 : vector<1x8x128xi1>
      %c0_34 = arith.constant 0 : index
      %c0_35 = arith.constant 0 : index
      %78 = vector.load %arg7[%c0_34, %c0_35] : memref<1x1xf32, #tpu.memory_space<vmem>>, vector<1x1xf32>
      %cst_36 = arith.constant 0.000000e+00 : f32
      %79 = vector.shape_cast %78 : vector<1x1xf32> to vector<1x1x1xf32>
      %80 = vector.broadcast %79 : vector<1x1x1xf32> to vector<1x8x128xf32>
      %81 = vector.broadcast %cst_36 : f32 to vector<1x8x128xf32>
      %82 = arith.select %77, %80, %81 : vector<1x8x128xi1>, vector<1x8x128xf32>
      %83 = arith.addf %74, %82 : vector<1x8x128xf32>
      %c0_37 = arith.constant 0 : index
      %c0_38 = arith.constant 0 : index
      %c0_39 = arith.constant 0 : index
      %84 = vector.load %arg4[%c0_37, %c0_38, %c0_39] : memref<1x8x128xf32, #tpu.memory_space<vmem>>, vector<1x8x128xf32>
      tpu.vector_store %arg4[%c0_37, %c0_38, %c0_39], %83 {strides = array<i32>} : memref<1x8x128xf32, #tpu.memory_space<vmem>>, vector<1x8x128xf32>,
    } else {
    }
    return
  }
  func.func @transform_0(%arg0: i32, %arg1: i32) -> (i32, i32) {
    %c1_i32 = arith.constant 1 : i32
    %0 = arith.muli %arg0, %c1_i32 : i32
    %1 = arith.addi %0, %arg1 : i32
    %c0_i32 = arith.constant 0 : i32
    %2 = arith.minsi %1, %c0_i32 : i32
    %c0_i32_0 = arith.constant 0 : i32
    %c0_i32_1 = arith.constant 0 : i32
    return %2, %c0_i32_0 : i32, i32
  }
  func.func @transform_1(%arg0: i32, %arg1: i32) -> (i32, i32) {
    %c1_i32 = arith.constant 1 : i32
    %0 = arith.muli %arg0, %c1_i32 : i32
    %1 = arith.addi %0, %arg1 : i32
    %c0_i32 = arith.constant 0 : i32
    %2 = arith.minsi %1, %c0_i32 : i32
    %c0_i32_0 = arith.constant 0 : i32
    %c0_i32_1 = arith.constant 0 : i32
    return %2, %c0_i32_0 : i32, i32
  }
  func.func @transform_2(%arg0: i32, %arg1: i32) -> (i32, i32, i32) {
    %c0_i32 = arith.constant 0 : i32
    %c0_i32_0 = arith.constant 0 : i32
    %c0_i32_1 = arith.constant 0 : i32
    return %arg0, %c0_i32, %c0_i32_0 : i32, i32, i32
  }
}

</mosaic_0001>

<llo_original>
// kernel: tpu_custom_call.1
$region0: #{tpu_custom_call.1}
  #allocation0 [shape = 'u32[]', space=smem, size = 0x4, offset = 0x4, fixed_abs, tag = 'smem constant byte address 0x4 - core index']
  #allocation1 [shape = 'u32[72,128]{1,0:T(1,128)}', space=vmem, size = 0x9000, scoped, tag = 'internal scratch']
  #allocation2 [shape = 'f32[1,1]{1,0:T(1,128)}', space=vmem, size = 0x200, scoped, tag = 'scratch operand']
  #allocation3 [shape = 'f32[1,1]{1,0:T(1,128)}', space=vmem, size = 0x200, scoped, tag = 'scratch operand']
  #allocation4 [shape = 'f32[1,1]{1,0:T(1,128)}', space=vmem, size = 0x200, scoped, tag = 'scratch operand']
  %s0 = inlined_call_operand.vmem [shape: f32[8,16], index: 0, kind: input, shape index: {}]
  %s1 = inlined_call_operand.vmem [shape: f32[8,3], index: 1, kind: input, shape index: {}]
  %s2 = inlined_call_operand.hbm [shape: f32[1,8,128], index: 2, kind: output, shape index: {}]
  %s3 = sld [smem:[#allocation0]]
  $region26: #{tpu_custom_call.1} parent=0
    _
  %s5 = ssub.s32 1, %s3
  %s6 = scalar_select 0, %s5, %s3
  $region1: #{tpu_custom_call.1} parent=0
    #allocation5 [shape = 'u8[4096]{0}', space=vmem, size = 0x1000, scoped, tag = 'output window, operand 0, single buffered']
    #allocation6 [shape = 's32[1]{0}', space=sflag, size = 0x4, scoped, tag = 'scoped memory for tpu_custom_call.1']
    %7 = vsyncpa [#allocation6], 0
    // Predicated region
    $region2: #{tpu_custom_call.1} parent=1 // pred_check
      _
    $region3: #{tpu_custom_call.1} parent=1 // pred_check_branch
      %9 = sbr.rel (0) target = $region5
    $region4: #{tpu_custom_call.1} parent=1 // pred_region
      %s10 = sadd.s32 0, 0
      %p11 = scmp.lt.s32.totalorder %s10, 0
      %s12 = scalar_select %p11, %s10, 0
      %p13 = scmp.lt.s32.totalorder %s12, 0
      %s14 = scalar_select %p13, %s12, 0
      %s15 = smul.addr %s14, 8
      %s16 = scalar_lea.vmem %s0, %s15
      %s17 = sadd.s32 0, 0
      %p18 = scmp.lt.s32.totalorder %s17, 0
      %s19 = scalar_select %p18, %s17, 0
    $region5: #{tpu_custom_call.1} parent=1 // pred_fallthru
      _
    // Predicated region
    $region6: #{tpu_custom_call.1} parent=1 // pred_check
      _
    $region7: #{tpu_custom_call.1} parent=1 // pred_check_branch
      %21 = sbr.rel (0) target = $region9
    $region8: #{tpu_custom_call.1} parent=1 // pred_region
      %s22 = sadd.s32 0, 0
      %p23 = scmp.lt.s32.totalorder %s22, 0
      %s24 = scalar_select %p23, %s22, 0
      %p25 = scmp.lt.s32.totalorder %s24, 0
      %s26 = scalar_select %p25, %s24, 0
      %s27 = smul.addr %s26, 8
      %s28 = scalar_lea.vmem %s1, %s27
      %s29 = sadd.s32 0, 0
      %p30 = scmp.lt.s32.totalorder %s29, 0
      %s31 = scalar_select %p30, %s29, 0
    $region9: #{tpu_custom_call.1} parent=1 // pred_fallthru
      _
    %s32 = sadd.s32 0, 0
    %p33 = scmp.lt.s32.totalorder %s32, 0
    %s34 = scalar_select %p33, %s32, 0
    %p35 = scmp.lt.s32.totalorder %s34, 0
    %s36 = scalar_select %p35, %s34, 0
    %s37 = smul.addr %s36, 8
    %s38 = scalar_lea.vmem %s0, %s37
    %s39 = sadd.s32 0, 0
    %p40 = scmp.lt.s32.totalorder %s39, 0
    %s41 = scalar_select %p40, %s39, 0
    %p42 = scmp.lt.s32.totalorder %s41, 0
    %s43 = scalar_select %p42, %s41, 0
    %s44 = smul.addr %s43, 8
    %s45 = scalar_lea.vmem %s1, %s44
    %s46 = sadd.s32 0, 0
    %p47 = scmp.lt.s32.totalorder %s46, 0
    %s48 = scalar_select %p47, %s46, 0
    %p49 = scmp.lt.s32.totalorder %s48, 0
    %s50 = scalar_select %p49, %s48, 0
    %s51 = smul.addr %s50, 8
    %s52 = scalar_lea.vmem %s0, %s51
    %s53 = sadd.s32 0, 0
    %p54 = scmp.lt.s32.totalorder %s53, 0
    %s55 = scalar_select %p54, %s53, 0
    %s56 = sadd.s32 0, 0
    %p57 = scmp.lt.s32.totalorder %s56, 0
    %s58 = scalar_select %p57, %s56, 0
    %p59 = scmp.lt.s32.totalorder %s58, 0
    %s60 = scalar_select %p59, %s58, 0
    %s61 = smul.addr %s60, 8
    %s62 = scalar_lea.vmem %s1, %s61
    %s63 = sadd.s32 0, 0
    %p64 = scmp.lt.s32.totalorder %s63, 0
    %s65 = scalar_select %p64, %s63, 0
    %p66 = scmp.eq.s32.totalorder 0, 0
    // Predicated region
    $region10: #{tpu_custom_call.1} parent=1 // pred_check
      %p67 = pneg %p66
    $region11: #{tpu_custom_call.1} parent=1 // pred_check_branch
      %69 = sbr.rel (%p67) target = $region13
    $region12: #{tpu_custom_call.1} parent=1 // pred_region
      %vm70 = vcmask 0
      %71 = vst.msk [vmem:[#allocation2] sm:$0x1] %vm70, 0.0
      %72 = vst.msk [vmem:[#allocation3] sm:$0x1] %vm70, 0.0
      %73 = vst.msk [vmem:[#allocation4] sm:$0x1] %vm70, 0.0
    $region13: #{tpu_custom_call.1} parent=1 // pred_fallthru
      _
    %v74 = vld [vmem:[%s52] sm:$0xff]
    %v75 = vld [vmem:[%s62] sm:$0xff]
    %v76 = vcvt.f32.s32.to.zero.pseudo %v75
    %vm77 = vcmask 130048
    %v78 = vsel %vm77, %v74, -inf
    %79 = vmax.xlane.f32.xlu0 %v78
    %v80 = vpop.xlane.xlu0 %79
    %v81 = vsub.f32 %v74, %v80
    %v82 = vmul.f32 %v81, 1.442695
    %v83 = vpow.pop %v82
    %v84 = vsel %vm77, %v83, 0.0
    %85 = vadd.xlane.f32.xlu0 %v84
    %v86 = vpop.xlane.xlu0 %85
    %v87 = vlog2.pop %v86
    %v88 = vmul.f32 %v87, 0.6931472
    %v89 = vadd.f32 %v88, %v80
    %v90 = vlaneseq
    %v91 = vand.u32 %v90, 127
    %92 = vset.pattern.permute.xlu0 0
    %93 = vperm.xlu0 %92, %v76
    %v94 = vpop.permute.xlu0 %93
    %vm95 = vcmp.eq.s32.totalorder %v91, %v94
    %v96 = vsel %vm95, %v74, 0.0
    %v97 = vsel %vm77, %v96, 0.0
    %98 = vadd.xlane.f32.xlu0 %v97
    %v99 = vpop.xlane.xlu0 %98
    %100 = vset.pattern.permute.xlu0 1
    %101 = vperm.xlu0 %100, %v76
    %v102 = vpop.permute.xlu0 %101
    %vm103 = vcmp.eq.s32.totalorder %v91, %v102
    %v104 = vsel %vm103, %v74, 0.0
    %v105 = vsel %vm77, %v104, 0.0
    %106 = vadd.xlane.f32.xlu0 %v105
    %v107 = vpop.xlane.xlu0 %106
    %v108 = vsub.f32 %v89, %v99
    %v109 = vsub.f32 %v89, %v107
    %v110 = vld [vmem:[#allocation2] sm:$0x1]
    %v111 = vrot.slane %v108, 4
    %v112 = vadd.f32 %v108, %v111
    %v113 = vrot.slane %v112, 2
    %v114 = vadd.f32 %v112, %v113
    %v115 = vrot.slane %v114, 1
    %v116 = vadd.f32 %v114, %v115
    %v117 = vadd.f32 %v110, %v116
    %vm118 = vcmask 0
    %119 = vst.msk [vmem:[#allocation2] sm:$0x1] %vm118, %v117
    %v120 = vld [vmem:[#allocation3] sm:$0x1]
    %v121 = vrot.slane %v109, 4
    %v122 = vadd.f32 %v109, %v121
    %v123 = vrot.slane %v122, 2
    %v124 = vadd.f32 %v122, %v123
    %v125 = vrot.slane %v124, 1
    %v126 = vadd.f32 %v124, %v125
    %v127 = vadd.f32 %v120, %v126
    %128 = vst.msk [vmem:[#allocation3] sm:$0x1] %vm118, %v127
    %v129 = vld [vmem:[#allocation4] sm:$0x1]
    %vm130 = vcmask 23568
    %v131 = vsel %vm130, %v75, 0.0
    %v132 = vrot.slane %v131, 4
    %v133 = vadd.f32 %v131, %v132
    %v134 = vrot.slane %v133, 2
    %v135 = vadd.f32 %v133, %v134
    %v136 = vrot.slane %v135, 1
    %v137 = vadd.f32 %v135, %v136
    %139 = vrot.lane.b32.xlu0 %v137, 126
    %v140 = vpop.permute.xlu0 %139
    %v142 = vadd.f32 %v129, %v140
    %143 = vst.msk [vmem:[#allocation4] sm:$0x1] %vm118, %v142
    // Predicated region
    $region14: #{tpu_custom_call.1} parent=1 // pred_check
      %p144 = pneg %p66
    $region15: #{tpu_custom_call.1} parent=1 // pred_check_branch
      %146 = sbr.rel (%p144) target = $region17
    $region16: #{tpu_custom_call.1} parent=1 // pred_region
      %v147 = vlaneseq
      %v148 = vshrl.u32 %v147, 7
      %vm149 = vcmp.eq.s32.totalorder %v148, 0
      %vm150 = vcmp.eq.s32.totalorder %v91, 0
      %vm151 = vmand %vm149, %vm150
      %v152 = vld [vmem:[#allocation2] sm:$0x1]
      %v154 = vperm.slane %v152, 0
      %155 = vset.pattern.permute.xlu0 0
      %156 = vperm.xlu0 %155, %v154
      %v157 = vpop.permute.xlu0 %156
      %v159 = vsel %vm151, %v157, 0.0
      %vm160 = vcmp.eq.s32.totalorder %v91, 1
      %vm161 = vmand %vm149, %vm160
      %v162 = vld [vmem:[#allocation3] sm:$0x1]
      %v164 = vperm.slane %v162, 0
      %165 = vset.pattern.permute.xlu0 0
      %166 = vperm.xlu0 %165, %v164
      %v167 = vpop.permute.xlu0 %166
      %v169 = vsel %vm161, %v167, 0.0
      %v170 = vadd.f32 %v159, %v169
      %vm171 = vcmp.eq.s32.totalorder %v91, 2
      %vm172 = vmand %vm149, %vm171
      %v173 = vld [vmem:[#allocation4] sm:$0x1]
      %v175 = vperm.slane %v173, 0
      %176 = vset.pattern.permute.xlu0 0
      %177 = vperm.xlu0 %176, %v175
      %v178 = vpop.permute.xlu0 %177
      %v180 = vsel %vm172, %v178, 0.0
      %v181 = vadd.f32 %v170, %v180
      %182 = vst [vmem:[#allocation5] sm:$0xff] %v181
    $region17: #{tpu_custom_call.1} parent=1 // pred_fallthru
      _
    // Predicated region
    $region18: #{tpu_custom_call.1} parent=1 // pred_check
      _
    $region19: #{tpu_custom_call.1} parent=1 // pred_check_branch
      %184 = sbr.rel (0) target = $region21
    $region20: #{tpu_custom_call.1} parent=1 // pred_region
      %186 = vsyncadd [#allocation6], 0
      %s188 = sshll.u32 [#allocation5], 4
      %s189 = int_to_ptr.vmem [resolvable:$true] %s188
      %s190 = sshll.u32 %s2, 4
      %s191 = int_to_ptr.hbm [resolvable:$true] %s190
      %193 = dma.vmem_to_hbm [thread:$0]  %s189, 128, %s191, [#allocation6]
    $region21: #{tpu_custom_call.1} parent=1 // pred_fallthru
      _
    // Predicated region
    $region22: #{tpu_custom_call.1} parent=1 // pred_check
      _
    $region23: #{tpu_custom_call.1} parent=1 // pred_check_branch
      %195 = sbr.rel (0) target = $region25
    $region24: #{tpu_custom_call.1} parent=1 // pred_region
      %197 = dma.done [#allocation6], 128
    $region25: #{tpu_custom_call.1} parent=1 // pred_fallthru
      _
    %198 = vsyncpa [#allocation6], 1

</llo_original>
